<compile_context>
chip_gen: v7x
topology: tpu7x:2x2x1
jax: 0.10.0
libtpu: 0.0.40
codegen_flags: <defaults>
</compile_context>

<pallas_src>
import functools

import numpy as np
import jax
import jax.numpy as jnp
from jax.experimental import pallas as pl
from jax.experimental.pallas import tpu as pltpu

_K = 7
_HALO = 3                                            # (K - 1) // 2


def _shift_w(x, j):
    """x shifted left by j along the last (lane) axis; the last j columns wrap
    around (garbage) and are overwritten by the in-kernel edge padding."""
    if j == 0:
        return x
    return jnp.concatenate([x[:, j:], x[:, :j]], axis=1)


def _csum(ref, r0=None, r1=None):
    """Channel-sum a (3, rows, W) ref (optionally a row sub-range) in f32."""
    x = ref[...] if r0 is None else ref[:, r0:r1, :]
    x = x.astype(jnp.float32)
    return x[0] + x[1] + x[2]


def _separable_sobel(window, n_rows):
    """window: (n_rows + 6, W) channel-summed rows.
    Returns |grad| for the n_rows output rows, already edge-padded along W to
    the full width: shape (n_rows, W)."""
    W = window.shape[-1]
    s = [_shift_w(window, j) for j in range(_K)]

    # Horizontal (lane) pass.  deriv = (4,2,1,0,-1,-2,-4), smooth = (1,1,1,2,1,1,1),
    # factored to minimise VALU ops.
    tdx = 4.0 * (s[0] - s[6]) + 2.0 * (s[1] - s[5]) + (s[2] - s[4])
    tsx = ((s[0] + s[6]) + (s[1] + s[5])) + ((s[2] + s[4]) + 2.0 * s[3])

    # Vertical (sublane) pass via static row slices of the intermediates.
    def rows(t, i):
        return t[i:i + n_rows, :]

    gx = (((rows(tdx, 0) + rows(tdx, 6)) + (rows(tdx, 1) + rows(tdx, 5)))
          + ((rows(tdx, 2) + rows(tdx, 4)) + 2.0 * rows(tdx, 3)))
    gy = (4.0 * (rows(tsx, 0) - rows(tsx, 6))
          + 2.0 * (rows(tsx, 1) - rows(tsx, 5))
          + (rows(tsx, 2) - rows(tsx, 4)))
    mag = jnp.sqrt(gx * gx + gy * gy)                            # (n_rows, W)

    # 'edge' padding of the conv output along W, done in-kernel so the store is
    # lane-dense (full W) and the wrapped garbage columns are overwritten.
    left = jnp.broadcast_to(mag[:, 0:1], (n_rows, _HALO))
    right = jnp.broadcast_to(mag[:, W - _K:W - _K + 1], (n_rows, _HALO))
    return jnp.concatenate([left, mag[:, 0:W - _K + 1], right], axis=1)


def _single_tile_kernel(H, W, x_ref, o_ref, mm_ref):
    """One whole image per grid step (small images / H not row-tileable)."""
    R = H - 2 * _HALO
    window = _csum(x_ref)                                        # (H, W)
    out_w = _separable_sobel(window, R)                          # (H-6, W)
    o_ref[_HALO:H - _HALO, :] = out_w
    o_ref[0:_HALO, :] = jnp.broadcast_to(out_w[0:1, :], (_HALO, W))
    o_ref[H - _HALO:H, :] = jnp.broadcast_to(out_w[R - 1:R, :], (_HALO, W))
    vals = o_ref[...]
    mm_ref[0:1, 0:1] = jnp.min(vals, axis=(0, 1), keepdims=True)
    mm_ref[0:1, 1:2] = jnp.max(vals, axis=(0, 1), keepdims=True)


def _tiled_kernel(TH, W, n_tiles, xtop_ref, xmid_ref, xbot_ref, o_ref, mm_ref):
    """Row-tiled path: a TH-row tile plus two 8-row halo blocks (clamped at the
    image boundary by the index_map)."""
    t = pl.program_id(1)
    window = jnp.concatenate(
        [_csum(xtop_ref, 8 - _HALO, 8),       # 3 halo rows above the tile
         _csum(xmid_ref),                     # the TH-row tile itself
         _csum(xbot_ref, 0, _HALO)],          # 3 halo rows below the tile
        axis=0)                                                  # (TH+6, W)
    out_w = _separable_sobel(window, TH)                         # (TH, W)
    o_ref[...] = out_w

    # Edge replication along H on the boundary tiles; also overwrites the
    # (finite) garbage rows computed from the clamped halo.
    @pl.when(t == 0)
    def _():
        o_ref[0:_HALO, :] = jnp.broadcast_to(
            out_w[_HALO:_HALO + 1, :], (_HALO, W))

    @pl.when(t == n_tiles - 1)
    def _():
        o_ref[TH - _HALO:TH, :] = jnp.broadcast_to(
            out_w[TH - _HALO - 1:TH - _HALO, :], (_HALO, W))

    vals = o_ref[...]   # after the fix-ups every row holds real data
    mm_ref[0:1, 0:1] = jnp.min(vals, axis=(0, 1), keepdims=True)
    mm_ref[0:1, 1:2] = jnp.max(vals, axis=(0, 1), keepdims=True)


def _pick_row_tile(H):
    if H % 8 != 0 or H <= 256 + 2 * _HALO:
        return H                     # small images: one tile per image
    for th in (256, 128, 64, 32, 16, 8):
        if H % th == 0:
            return th
    return H


@functools.partial(jax.jit, static_argnames=("row_tile",))
def sobel_filter(img, row_tile=None):
    """JAX/Pallas equivalent of SobelFilter.forward.  img: (N, 3, H, W)."""
    N, C, H, W = img.shape
    assert C == 3, "SobelFilter expects 3 input channels"
    assert H >= _K and W >= _K, "spatial dims must be >= 7"

    TH = row_tile if row_tile is not None else _pick_row_tile(H)
    if TH >= H or TH < 8 or H % TH != 0 or TH % 8 != 0 or H % 8 != 0:
        TH = H
    n_tiles = H // TH

    mag_shape = jax.ShapeDtypeStruct((N, H, W), jnp.float32)
    mm_shape = jax.ShapeDtypeStruct((N, n_tiles, 1, 2), jnp.float32)
    cparams = pltpu.CompilerParams(
        dimension_semantics=("parallel",) * (1 if n_tiles == 1 else 2),
        vmem_limit_bytes=64 * 1024 * 1024)

    if n_tiles == 1:
        mag, mm = pl.pallas_call(
            functools.partial(_single_tile_kernel, H, W),
            grid=(N,),
            in_specs=[pl.BlockSpec((pl.Squeezed(), 3, H, W),
                                   lambda n: (n, 0, 0, 0))],
            out_specs=[
                pl.BlockSpec((pl.Squeezed(), H, W), lambda n: (n, 0, 0)),
                pl.BlockSpec((pl.Squeezed(), pl.Squeezed(), 1, 2),
                             lambda n: (n, 0, 0, 0)),
            ],
            out_shape=(mag_shape, mm_shape),
            compiler_params=cparams,
        )(img)
    else:
        hb = TH // 8                 # row tile measured in 8-row halo blocks
        last_hblk = H // 8 - 1
        mag, mm = pl.pallas_call(
            functools.partial(_tiled_kernel, TH, W, n_tiles),
            grid=(N, n_tiles),
            in_specs=[
                # 8-row halo above the tile (index clamped at the top edge)
                pl.BlockSpec((pl.Squeezed(), 3, 8, W),
                             lambda n, t: (n, 0, jnp.maximum(t * hb - 1, 0), 0)),
                # the row tile itself (all 3 channels; summed in-kernel)
                pl.BlockSpec((pl.Squeezed(), 3, TH, W),
                             lambda n, t: (n, 0, t, 0)),
                # 8-row halo below the tile (index clamped at the bottom edge)
                pl.BlockSpec((pl.Squeezed(), 3, 8, W),
                             lambda n, t: (n, 0, jnp.minimum((t + 1) * hb, last_hblk), 0)),
            ],
            out_specs=[
                pl.BlockSpec((pl.Squeezed(), TH, W), lambda n, t: (n, t, 0)),
                pl.BlockSpec((pl.Squeezed(), pl.Squeezed(), 1, 2),
                             lambda n, t: (n, t, 0, 0)),
            ],
            out_shape=(mag_shape, mm_shape),
            compiler_params=cparams,
        )(img, img, img)

    # Global min/max from the fused per-block partials, then a cheap fused
    # elementwise normalize (matches: res -= res.min(); res /= res.max()).
    gmin = jnp.min(mm[..., 0])
    gmax = jnp.max(mm[..., 1])
    span = gmax - gmin
    # Guard only changes behavior for degenerate constant inputs (torch NaNs there).
    span = jnp.where(span > 0, span, jnp.float32(1.0))
    res = (mag - gmin) * (jnp.float32(1.0) / span)
    return res[:, None, :, :]


def _reference(img):
    """Pure NumPy (float64) reference of SobelFilter.forward."""
    kx = np.array([[4, 2, 1, 0, -1, -2, -4]] * 3
                  + [[8, 4, 2, 0, -2, -4, -8]]
                  + [[4, 2, 1, 0, -1, -2, -4]] * 3, dtype=np.float64)
    ky = kx.T
    x = np.asarray(img, dtype=np.float64)
    N, C, H, W = x.shape
    Ho, Wo = H - 6, W - 6
    gx = np.zeros((N, Ho, Wo))
    gy = np.zeros((N, Ho, Wo))
    for i in range(7):
        for j in range(7):
            patch = x[:, :, i:i + Ho, j:j + Wo].sum(axis=1)
            gx += kx[i, j] * patch
            gy += ky[i, j] * patch
    gx = np.pad(gx, ((0, 0), (3, 3), (3, 3)), mode="edge")
    gy = np.pad(gy, ((0, 0), (3, 3), (3, 3)), mode="edge")
    res = np.sqrt(gx * gx + gy * gy)
    res -= res.min()
    res /= res.max()
    return res[:, None]


if __name__ == "__main__":
    key = jax.random.PRNGKey(0)
    k1, k2 = jax.random.split(key)

    # Small shape -> single-tile path (block dims equal the full array dims).
    img = jax.random.uniform(k1, (2, 3, 16, 16), dtype=jnp.float32)
    out = jax.block_until_ready(sobel_filter(img))

    # Larger shape -> row-tiled halo path (4 row tiles of 32, W lane-dense).
    img_large = jax.random.uniform(k2, (1, 3, 128, 256), dtype=jnp.float32)
    out_large = jax.block_until_ready(sobel_filter(img_large, row_tile=32))

    np.testing.assert_allclose(np.asarray(out), _reference(np.asarray(img)),
                               rtol=1e-4, atol=1e-4)
    np.testing.assert_allclose(np.asarray(out_large), _reference(np.asarray(img_large)),
                               rtol=1e-4, atol=1e-4)
    print("KERNEL_OK")
</pallas_src>

<mosaic_0001>
module attributes {stable_mosaic.version = 11 : i64} {
  func.func @_single_tile_kernel(%arg0: i32, %arg1: memref<1x3x16x16xf32, #tpu.memory_space<vmem>>, %arg2: memref<1x16x16xf32, #tpu.memory_space<vmem>>, %arg3: memref<1x1x1x2xf32, #tpu.memory_space<vmem>>) attributes {dimension_semantics = [#tpu.dimension_semantics<parallel>], iteration_bounds = array<i64: 2>, scalar_prefetch = 0 : i64, scratch_operands = 0 : i64, tpu.core_type = #tpu.core_type<tc>, window_params = [{transform_indices = @transform_0, window_bounds = array<i64: 1, 3, 16, 16>}, {transform_indices = @transform_1, window_bounds = array<i64: 1, 16, 16>}, {transform_indices = @transform_2, window_bounds = array<i64: 1, 1, 1, 2>}]} {
    %c0 = arith.constant 0 : index
    %c0_0 = arith.constant 0 : index
    %c0_1 = arith.constant 0 : index
    %c0_2 = arith.constant 0 : index
    %0 = vector.load %arg1[%c0, %c0_0, %c0_1, %c0_2] : memref<1x3x16x16xf32, #tpu.memory_space<vmem>>, vector<1x3x16x16xf32>
    %1 = vector.shape_cast %0 : vector<1x3x16x16xf32> to vector<3x16x16xf32>
    %2 = vector.extract_strided_slice %1 {offsets = [0, 0, 0], sizes = [1, 16, 16], strides = [1, 1, 1]} : vector<3x16x16xf32> to vector<1x16x16xf32>
    %3 = vector.shape_cast %2 : vector<1x16x16xf32> to vector<16x16xf32>
    %4 = vector.extract_strided_slice %1 {offsets = [1, 0, 0], sizes = [1, 16, 16], strides = [1, 1, 1]} : vector<3x16x16xf32> to vector<1x16x16xf32>
    %5 = vector.shape_cast %4 : vector<1x16x16xf32> to vector<16x16xf32>
    %6 = arith.addf %3, %5 : vector<16x16xf32>
    %7 = vector.extract_strided_slice %1 {offsets = [2, 0, 0], sizes = [1, 16, 16], strides = [1, 1, 1]} : vector<3x16x16xf32> to vector<1x16x16xf32>
    %8 = vector.shape_cast %7 : vector<1x16x16xf32> to vector<16x16xf32>
    %9 = arith.addf %6, %8 : vector<16x16xf32>
    %10 = vector.extract_strided_slice %9 {offsets = [0, 1], sizes = [16, 15], strides = [1, 1]} : vector<16x16xf32> to vector<16x15xf32>
    %11 = vector.extract_strided_slice %9 {offsets = [0, 0], sizes = [16, 1], strides = [1, 1]} : vector<16x16xf32> to vector<16x1xf32>
    %12 = tpu.concatenate %10, %11 in 1 : vector<16x15xf32>, vector<16x1xf32> -> vector<16x16xf32>
    %13 = vector.extract_strided_slice %9 {offsets = [0, 2], sizes = [16, 14], strides = [1, 1]} : vector<16x16xf32> to vector<16x14xf32>
    %14 = vector.extract_strided_slice %9 {offsets = [0, 0], sizes = [16, 2], strides = [1, 1]} : vector<16x16xf32> to vector<16x2xf32>
    %15 = tpu.concatenate %13, %14 in 1 : vector<16x14xf32>, vector<16x2xf32> -> vector<16x16xf32>
    %16 = vector.extract_strided_slice %9 {offsets = [0, 3], sizes = [16, 13], strides = [1, 1]} : vector<16x16xf32> to vector<16x13xf32>
    %17 = vector.extract_strided_slice %9 {offsets = [0, 0], sizes = [16, 3], strides = [1, 1]} : vector<16x16xf32> to vector<16x3xf32>
    %18 = tpu.concatenate %16, %17 in 1 : vector<16x13xf32>, vector<16x3xf32> -> vector<16x16xf32>
    %19 = vector.extract_strided_slice %9 {offsets = [0, 4], sizes = [16, 12], strides = [1, 1]} : vector<16x16xf32> to vector<16x12xf32>
    %20 = vector.extract_strided_slice %9 {offsets = [0, 0], sizes = [16, 4], strides = [1, 1]} : vector<16x16xf32> to vector<16x4xf32>
    %21 = tpu.concatenate %19, %20 in 1 : vector<16x12xf32>, vector<16x4xf32> -> vector<16x16xf32>
    %22 = vector.extract_strided_slice %9 {offsets = [0, 5], sizes = [16, 11], strides = [1, 1]} : vector<16x16xf32> to vector<16x11xf32>
    %23 = vector.extract_strided_slice %9 {offsets = [0, 0], sizes = [16, 5], strides = [1, 1]} : vector<16x16xf32> to vector<16x5xf32>
    %24 = tpu.concatenate %22, %23 in 1 : vector<16x11xf32>, vector<16x5xf32> -> vector<16x16xf32>
    %25 = vector.extract_strided_slice %9 {offsets = [0, 6], sizes = [16, 10], strides = [1, 1]} : vector<16x16xf32> to vector<16x10xf32>
    %26 = vector.extract_strided_slice %9 {offsets = [0, 0], sizes = [16, 6], strides = [1, 1]} : vector<16x16xf32> to vector<16x6xf32>
    %27 = tpu.concatenate %25, %26 in 1 : vector<16x10xf32>, vector<16x6xf32> -> vector<16x16xf32>
    %28 = arith.subf %9, %27 : vector<16x16xf32>
    %cst = arith.constant 4.000000e+00 : f32
    %29 = vector.broadcast %cst : f32 to vector<16x16xf32>
    %30 = arith.mulf %29, %28 : vector<16x16xf32>
    %31 = arith.subf %12, %24 : vector<16x16xf32>
    %cst_3 = arith.constant 2.000000e+00 : f32
    %32 = vector.broadcast %cst_3 : f32 to vector<16x16xf32>
    %33 = arith.mulf %32, %31 : vector<16x16xf32>
    %34 = arith.addf %30, %33 : vector<16x16xf32>
    %35 = arith.subf %15, %21 : vector<16x16xf32>
    %36 = arith.addf %34, %35 : vector<16x16xf32>
    %37 = arith.addf %9, %27 : vector<16x16xf32>
    %38 = arith.addf %12, %24 : vector<16x16xf32>
    %39 = arith.addf %37, %38 : vector<16x16xf32>
    %40 = arith.addf %15, %21 : vector<16x16xf32>
    %cst_4 = arith.constant 2.000000e+00 : f32
    %41 = vector.broadcast %cst_4 : f32 to vector<16x16xf32>
    %42 = arith.mulf %41, %18 : vector<16x16xf32>
    %43 = arith.addf %40, %42 : vector<16x16xf32>
    %44 = arith.addf %39, %43 : vector<16x16xf32>
    %45 = vector.extract_strided_slice %36 {offsets = [0, 0], sizes = [10, 16], strides = [1, 1]} : vector<16x16xf32> to vector<10x16xf32>
    %46 = vector.extract_strided_slice %36 {offsets = [6, 0], sizes = [10, 16], strides = [1, 1]} : vector<16x16xf32> to vector<10x16xf32>
    %47 = arith.addf %45, %46 : vector<10x16xf32>
    %48 = vector.extract_strided_slice %36 {offsets = [1, 0], sizes = [10, 16], strides = [1, 1]} : vector<16x16xf32> to vector<10x16xf32>
    %49 = vector.extract_strided_slice %36 {offsets = [5, 0], sizes = [10, 16], strides = [1, 1]} : vector<16x16xf32> to vector<10x16xf32>
    %50 = arith.addf %48, %49 : vector<10x16xf32>
    %51 = arith.addf %47, %50 : vector<10x16xf32>
    %52 = vector.extract_strided_slice %36 {offsets = [2, 0], sizes = [10, 16], strides = [1, 1]} : vector<16x16xf32> to vector<10x16xf32>
    %53 = vector.extract_strided_slice %36 {offsets = [4, 0], sizes = [10, 16], strides = [1, 1]} : vector<16x16xf32> to vector<10x16xf32>
    %54 = arith.addf %52, %53 : vector<10x16xf32>
    %55 = vector.extract_strided_slice %36 {offsets = [3, 0], sizes = [10, 16], strides = [1, 1]} : vector<16x16xf32> to vector<10x16xf32>
    %cst_5 = arith.constant 2.000000e+00 : f32
    %56 = vector.broadcast %cst_5 : f32 to vector<10x16xf32>
    %57 = arith.mulf %56, %55 : vector<10x16xf32>
    %58 = arith.addf %54, %57 : vector<10x16xf32>
    %59 = arith.addf %51, %58 : vector<10x16xf32>
    %60 = vector.extract_strided_slice %44 {offsets = [0, 0], sizes = [10, 16], strides = [1, 1]} : vector<16x16xf32> to vector<10x16xf32>
    %61 = vector.extract_strided_slice %44 {offsets = [6, 0], sizes = [10, 16], strides = [1, 1]} : vector<16x16xf32> to vector<10x16xf32>
    %62 = arith.subf %60, %61 : vector<10x16xf32>
    %cst_6 = arith.constant 4.000000e+00 : f32
    %63 = vector.broadcast %cst_6 : f32 to vector<10x16xf32>
    %64 = arith.mulf %63, %62 : vector<10x16xf32>
    %65 = vector.extract_strided_slice %44 {offsets = [1, 0], sizes = [10, 16], strides = [1, 1]} : vector<16x16xf32> to vector<10x16xf32>
    %66 = vector.extract_strided_slice %44 {offsets = [5, 0], sizes = [10, 16], strides = [1, 1]} : vector<16x16xf32> to vector<10x16xf32>
    %67 = arith.subf %65, %66 : vector<10x16xf32>
    %cst_7 = arith.constant 2.000000e+00 : f32
    %68 = vector.broadcast %cst_7 : f32 to vector<10x16xf32>
    %69 = arith.mulf %68, %67 : vector<10x16xf32>
    %70 = arith.addf %64, %69 : vector<10x16xf32>
    %71 = vector.extract_strided_slice %44 {offsets = [2, 0], sizes = [10, 16], strides = [1, 1]} : vector<16x16xf32> to vector<10x16xf32>
    %72 = vector.extract_strided_slice %44 {offsets = [4, 0], sizes = [10, 16], strides = [1, 1]} : vector<16x16xf32> to vector<10x16xf32>
    %73 = arith.subf %71, %72 : vector<10x16xf32>
    %74 = arith.addf %70, %73 : vector<10x16xf32>
    %75 = arith.mulf %59, %59 : vector<10x16xf32>
    %76 = arith.mulf %74, %74 : vector<10x16xf32>
    %77 = arith.addf %75, %76 : vector<10x16xf32>
    %78 = math.sqrt %77 : vector<10x16xf32>
    %79 = vector.extract_strided_slice %78 {offsets = [0, 0], sizes = [10, 1], strides = [1, 1]} : vector<10x16xf32> to vector<10x1xf32>
    %80 = vector.shape_cast %79 : vector<10x1xf32> to vector<10x1xf32>
    %81 = vector.broadcast %80 : vector<10x1xf32> to vector<10x3xf32>
    %82 = vector.extract_strided_slice %78 {offsets = [0, 9], sizes = [10, 1], strides = [1, 1]} : vector<10x16xf32> to vector<10x1xf32>
    %83 = vector.shape_cast %82 : vector<10x1xf32> to vector<10x1xf32>
    %84 = vector.broadcast %83 : vector<10x1xf32> to vector<10x3xf32>
    %85 = vector.extract_strided_slice %78 {offsets = [0, 0], sizes = [10, 10], strides = [1, 1]} : vector<10x16xf32> to vector<10x10xf32>
    %86 = tpu.concatenate %81, %85, %84 in 1 : vector<10x3xf32>, vector<10x10xf32>, vector<10x3xf32> -> vector<10x16xf32>
    %c0_8 = arith.constant 0 : index
    %c3 = arith.constant 3 : index
    %c0_9 = arith.constant 0 : index
    %87 = vector.load %arg2[%c0_8, %c3, %c0_9] : memref<1x16x16xf32, #tpu.memory_space<vmem>>, vector<1x10x16xf32>
    %88 = vector.shape_cast %87 : vector<1x10x16xf32> to vector<10x16xf32>
    %89 = vector.shape_cast %86 : vector<10x16xf32> to vector<1x10x16xf32>
    tpu.vector_store %arg2[%c0_8, %c3, %c0_9], %89 {strides = array<i32>} : memref<1x16x16xf32, #tpu.memory_space<vmem>>, vector<1x10x16xf32>,
    %90 = vector.extract_strided_slice %86 {offsets = [0, 0], sizes = [1, 16], strides = [1, 1]} : vector<10x16xf32> to vector<1x16xf32>
    %91 = vector.shape_cast %90 : vector<1x16xf32> to vector<1x16xf32>
    %92 = vector.broadcast %91 : vector<1x16xf32> to vector<3x16xf32>
    %c0_10 = arith.constant 0 : index
    %c0_11 = arith.constant 0 : index
    %c0_12 = arith.constant 0 : index
    %93 = vector.load %arg2[%c0_10, %c0_11, %c0_12] : memref<1x16x16xf32, #tpu.memory_space<vmem>>, vector<1x3x16xf32>
    %94 = vector.shape_cast %93 : vector<1x3x16xf32> to vector<3x16xf32>
    %95 = vector.shape_cast %92 : vector<3x16xf32> to vector<1x3x16xf32>
    tpu.vector_store %arg2[%c0_10, %c0_11, %c0_12], %95 {strides = array<i32>} : memref<1x16x16xf32, #tpu.memory_space<vmem>>, vector<1x3x16xf32>,
    %96 = vector.extract_strided_slice %86 {offsets = [9, 0], sizes = [1, 16], strides = [1, 1]} : vector<10x16xf32> to vector<1x16xf32>
    %97 = vector.shape_cast %96 : vector<1x16xf32> to vector<1x16xf32>
    %98 = vector.broadcast %97 : vector<1x16xf32> to vector<3x16xf32>
    %c0_13 = arith.constant 0 : index
    %c13 = arith.constant 13 : index
    %c0_14 = arith.constant 0 : index
    %99 = vector.load %arg2[%c0_13, %c13, %c0_14] : memref<1x16x16xf32, #tpu.memory_space<vmem>>, vector<1x3x16xf32>
    %100 = vector.shape_cast %99 : vector<1x3x16xf32> to vector<3x16xf32>
    %101 = vector.shape_cast %98 : vector<3x16xf32> to vector<1x3x16xf32>
    tpu.vector_store %arg2[%c0_13, %c13, %c0_14], %101 {strides = array<i32>} : memref<1x16x16xf32, #tpu.memory_space<vmem>>, vector<1x3x16xf32>,
    %c0_15 = arith.constant 0 : index
    %c0_16 = arith.constant 0 : index
    %c0_17 = arith.constant 0 : index
    %102 = vector.load %arg2[%c0_15, %c0_16, %c0_17] : memref<1x16x16xf32, #tpu.memory_space<vmem>>, vector<1x16x16xf32>
    %103 = vector.shape_cast %102 : vector<1x16x16xf32> to vector<16x16xf32>
    %104 = vector.shape_cast %103 : vector<16x16xf32> to vector<1x16x16xf32>
    %cst_18 = arith.constant dense<0x7F800000> : vector<1xf32>
    %105 = vector.multi_reduction <minimumf>, %104, %cst_18 [1, 2] : vector<1x16x16xf32> to vector<1xf32>
    %106 = vector.shape_cast %105 : vector<1xf32> to vector<1x1x1xf32>
    %107 = vector.extract %106[0, 0, 0] : f32 from vector<1x1x1xf32>
    %108 = vector.broadcast %107 : f32 to vector<1x1xf32>
    %c0_19 = arith.constant 0 : index
    %c0_20 = arith.constant 0 : index
    %c0_21 = arith.constant 0 : index
    %c0_22 = arith.constant 0 : index
    %109 = vector.load %arg3[%c0_19, %c0_20, %c0_21, %c0_22] : memref<1x1x1x2xf32, #tpu.memory_space<vmem>>, vector<1x1x1x1xf32>
    %110 = vector.shape_cast %109 : vector<1x1x1x1xf32> to vector<1x1xf32>
    %111 = vector.shape_cast %108 : vector<1x1xf32> to vector<1x1x1x1xf32>
    tpu.vector_store %arg3[%c0_19, %c0_20, %c0_21, %c0_22], %111 {strides = array<i32>} : memref<1x1x1x2xf32, #tpu.memory_space<vmem>>, vector<1x1x1x1xf32>,
    %112 = vector.shape_cast %103 : vector<16x16xf32> to vector<1x16x16xf32>
    %cst_23 = arith.constant dense<0xFF800000> : vector<1xf32>
    %113 = vector.multi_reduction <maximumf>, %112, %cst_23 [1, 2] : vector<1x16x16xf32> to vector<1xf32>
    %114 = vector.shape_cast %113 : vector<1xf32> to vector<1x1x1xf32>
    %115 = vector.extract %114[0, 0, 0] : f32 from vector<1x1x1xf32>
    %116 = vector.broadcast %115 : f32 to vector<1x1xf32>
    %c0_24 = arith.constant 0 : index
    %c0_25 = arith.constant 0 : index
    %c0_26 = arith.constant 0 : index
    %c1 = arith.constant 1 : index
    %117 = vector.load %arg3[%c0_24, %c0_25, %c0_26, %c1] : memref<1x1x1x2xf32, #tpu.memory_space<vmem>>, vector<1x1x1x1xf32>
    %118 = vector.shape_cast %117 : vector<1x1x1x1xf32> to vector<1x1xf32>
    %119 = vector.shape_cast %116 : vector<1x1xf32> to vector<1x1x1x1xf32>
    tpu.vector_store %arg3[%c0_24, %c0_25, %c0_26, %c1], %119 {strides = array<i32>} : memref<1x1x1x2xf32, #tpu.memory_space<vmem>>, vector<1x1x1x1xf32>,
    return
  }
  func.func @transform_0(%arg0: i32) -> (i32, i32, i32, i32) {
    %c0_i32 = arith.constant 0 : i32
    %c0_i32_0 = arith.constant 0 : i32
    %c0_i32_1 = arith.constant 0 : i32
    %c0_i32_2 = arith.constant 0 : i32
    return %arg0, %c0_i32, %c0_i32_0, %c0_i32_1 : i32, i32, i32, i32
  }
  func.func @transform_1(%arg0: i32) -> (i32, i32, i32) {
    %c0_i32 = arith.constant 0 : i32
    %c0_i32_0 = arith.constant 0 : i32
    %c0_i32_1 = arith.constant 0 : i32
    return %arg0, %c0_i32, %c0_i32_0 : i32, i32, i32
  }
  func.func @transform_2(%arg0: i32) -> (i32, i32, i32, i32) {
    %c0_i32 = arith.constant 0 : i32
    %c0_i32_0 = arith.constant 0 : i32
    %c0_i32_1 = arith.constant 0 : i32
    %c0_i32_2 = arith.constant 0 : i32
    return %arg0, %c0_i32, %c0_i32_0, %c0_i32_1 : i32, i32, i32, i32
  }
}

</mosaic_0001>

<llo_original>
// kernel: sobel_filter.1
$region0: #{sobel_filter.1}
  #allocation0 [shape = 'u32[]', space=smem, size = 0x4, offset = 0x4, fixed_abs, tag = 'smem constant byte address 0x4 - core index']
  #allocation1 [shape = 'u32[144,128]{1,0:T(1,128)}', space=vmem, size = 0x12000, scoped, tag = 'internal scratch']
  %s0 = inlined_call_operand.hbm [shape: f32[2,3,16,16], index: 0, kind: input, shape index: {}]
  %s1 = inlined_call_operand.hbm [shape: f32[2,16,16], index: 1, kind: output, shape index: {0}]
  %s2 = inlined_call_operand.hbm [shape: f32[2,1,1,2], index: 2, kind: output, shape index: {1}]
  %3 = xla_tuple %s1, %s2
  %s4 = sld [smem:[#allocation0]]
  $region49: #{sobel_filter.1} parent=0
    _
  %s6 = ssub.s32 1, %s4
  %s7 = scalar_select 0, %s6, %s4
  $region1: #{sobel_filter.1} parent=0
    #allocation2 [shape = 'u8[49152]{0}', space=vmem, size = 0xc000, scoped, tag = 'input window, operand 0']
    #allocation3 [shape = 's32[2]{0}', space=sflag, size = 0x8, scoped, tag = 'scoped memory for sobel_filter.1']
    #allocation4 [shape = 's32[2]{0}', space=sflag, size = 0x8, scoped, tag = 'scoped memory for sobel_filter.1']
    #allocation5 [shape = 'u8[16384]{0}', space=vmem, size = 0x4000, scoped, tag = 'output window, operand 0']
    #allocation6 [shape = 'u8[1024]{0}', space=vmem, size = 0x400, scoped, tag = 'output window, operand 1']
    #allocation7 [shape = 's32[2]{0}', space=sflag, size = 0x8, scoped, tag = 'scoped memory for sobel_filter.1']
    %8 = vsyncpa [#allocation3], 0
    %s9 = scalar_lea.sflag [#allocation3], 1
    %10 = vsyncpa %s9, 0
    %11 = vsyncpa [#allocation4], 0
    %s12 = scalar_lea.sflag [#allocation4], 1
    %13 = vsyncpa %s12, 0
    %14 = vsyncpa [#allocation7], 0
    %s15 = scalar_lea.sflag [#allocation7], 1
    %16 = vsyncpa %s15, 0
    loop: start=0, step=1, limit=4
    $region2: #{sobel_filter.1} parent=1 // loop_pre_header
      _
    $region3: #{sobel_filter.1} parent=1 // loop_header
      %s18 = sphi 0, %s22
      %p19 = scmp.ge.s32.totalorder %s18, 4
      %s28 = sphi 0, %s30
      %s31 = sphi 0, %s28
      %s32 = sphi 0, %s31
      %s48 = sphi 0, %s32
      %s54 = sphi 0, %s56
      %s57 = sphi 0, %s54
      %s58 = sphi 0, %s57
      %s74 = sphi 0, %s58
      %s80 = sphi 0, %s82
      %s83 = sphi 0, %s80
      %s84 = sphi 0, %s83
      %s100 = sphi 0, %s84
    $region4: #{sobel_filter.1} parent=1 // loop_header_branch
      %21 = sbr.rel (%p19) target = $region8
    $region5: #{sobel_filter.1} parent=1 // loop_body
      %s23 = ssub.s32 %s18, 1
      %s24 = ssub.s32 %s18, 2
      %s25 = sadd.s32 %s18, 1
      %s26 = ssub.s32 %s18, %s25
      %p27 = scmp.eq.s32.totalorder %s26, 0
      %s29 = sadd.s32 %s28, 1
      %s30 = scalar_select %p27, %s28, %s29
      %p33 = pneg %p27
      %p34 = scmp.eq.s32.totalorder %s18, 1
      %p35 = por %p33, %p34
      %p36 = scmp.ne.s32.totalorder %s28, %s31
      %p37 = scmp.eq.s32.totalorder %s18, 0
      %p38 = por %p36, %p37
      %p39 = scmp.ne.s32.totalorder %s28, %s31
      %p40 = scmp.eq.s32.totalorder %s23, 1
      %p41 = por %p39, %p40
      %p42 = scmp.ne.s32.totalorder %s31, %s32
      %p43 = scmp.eq.s32.totalorder %s23, 0
      %p44 = por %p42, %p43
      %p45 = scmp.ne.s32.totalorder %s31, %s32
      %p46 = scmp.eq.s32.totalorder %s24, 1
      %p47 = por %p45, %p46
      %p49 = scmp.ne.s32.totalorder %s32, %s48
      %p50 = scmp.eq.s32.totalorder %s24, 0
      %p51 = por %p49, %p50
      %s52 = ssub.s32 %s18, %s25
      %p53 = scmp.eq.s32.totalorder %s52, 0
      %s55 = sadd.s32 %s54, 1
      %s56 = scalar_select %p53, %s54, %s55
      %p59 = pneg %p53
      %p60 = scmp.eq.s32.totalorder %s18, 1
      %p61 = por %p59, %p60
      %p62 = scmp.ne.s32.totalorder %s54, %s57
      %p63 = scmp.eq.s32.totalorder %s18, 0
      %p64 = por %p62, %p63
      %p65 = scmp.ne.s32.totalorder %s54, %s57
      %p66 = scmp.eq.s32.totalorder %s23, 1
      %p67 = por %p65, %p66
      %p68 = scmp.ne.s32.totalorder %s57, %s58
      %p69 = scmp.eq.s32.totalorder %s23, 0
      %p70 = por %p68, %p69
      %p71 = scmp.ne.s32.totalorder %s57, %s58
      %p72 = scmp.eq.s32.totalorder %s24, 1
      %p73 = por %p71, %p72
      %p75 = scmp.ne.s32.totalorder %s58, %s74
      %p76 = scmp.eq.s32.totalorder %s24, 0
      %p77 = por %p75, %p76
      %s78 = ssub.s32 %s18, %s25
      %p79 = scmp.eq.s32.totalorder %s78, 0
      %s81 = sadd.s32 %s80, 1
      %s82 = scalar_select %p79, %s80, %s81
      %p85 = pneg %p79
      %p86 = scmp.eq.s32.totalorder %s18, 1
      %p87 = por %p85, %p86
      %p88 = scmp.ne.s32.totalorder %s80, %s83
      %p89 = scmp.eq.s32.totalorder %s18, 0
      %p90 = por %p88, %p89
      %p91 = scmp.ne.s32.totalorder %s80, %s83
      %p92 = scmp.eq.s32.totalorder %s23, 1
      %p93 = por %p91, %p92
      %p94 = scmp.ne.s32.totalorder %s83, %s84
      %p95 = scmp.eq.s32.totalorder %s23, 0
      %p96 = por %p94, %p95
      %p97 = scmp.ne.s32.totalorder %s83, %s84
      %p98 = scmp.eq.s32.totalorder %s24, 1
      %p99 = por %p97, %p98
      %p101 = scmp.ne.s32.totalorder %s84, %s100
      %p102 = scmp.eq.s32.totalorder %s24, 0
      %p103 = por %p101, %p102
      %p104 = scmp.le.s32.totalorder 1, %s18
      %p105 = scmp.lt.s32.totalorder %s18, 3
      %p106 = pnand %p104, %p105
      %p107 = pneg %p106
      // Predicated region
      $region9: #{sobel_filter.1} parent=5 // pred_check
        _
      $region10: #{sobel_filter.1} parent=5 // pred_check_branch
        %109 = sbr.rel (%p106) target = $region12
      $region11: #{sobel_filter.1} parent=5 // pred_region
        %s110 = ssub.s32 %s18, 1
      $region12: #{sobel_filter.1} parent=5 // pred_fallthru
        _
      %p111 = scmp.lt.s32.totalorder %s18, 2
      // Predicated region
      $region13: #{sobel_filter.1} parent=5 // pred_check
        %p112 = pneg %p111
      $region14: #{sobel_filter.1} parent=5 // pred_check_branch
        %114 = sbr.rel (%p112) target = $region16
      $region15: #{sobel_filter.1} parent=5 // pred_region
        // Predicated region
        $region17: #{sobel_filter.1} parent=15 // pred_check
          %p115 = pneg %p38
        $region18: #{sobel_filter.1} parent=15 // pred_check_branch
          %117 = sbr.rel (%p115) target = $region20
        $region19: #{sobel_filter.1} parent=15 // pred_region
          %s118 = sand.u32 %s28, 1
          %s119 = scalar_lea.sflag [#allocation3], %s118
          %s120 = sand.u32 %s28, 1
          %s121 = smul.addr %s120, 48
          %s122 = scalar_lea.vmem [#allocation2], %s121
          %s124 = ssub.s32 768, 768
          %125 = vsyncadd %s119, %s124
          %s126 = smul.addr %s18, 6
          %s127 = smul.addr %s126, 128
          %s128 = scalar_lea.hbm %s0, %s127
          %s129 = sshll.u32 %s122, 4
          %s130 = int_to_ptr.vmem [resolvable:$true] %s129
          %135 = dma.hbm_to_vmem [thread:$0]  %s128, 768, %s130, %s119, 128, 128, 8
        $region20: #{sobel_filter.1} parent=15 // pred_fallthru
          _
      $region16: #{sobel_filter.1} parent=5 // pred_fallthru
        _
      %p136 = scmp.le.s32.totalorder 1, %s18
      %p137 = scmp.lt.s32.totalorder %s18, 3
      %p138 = pnand %p136, %p137
      %p139 = pneg %p138
      // Predicated region
      $region21: #{sobel_filter.1} parent=5 // pred_check
        _
      $region22: #{sobel_filter.1} parent=5 // pred_check_branch
        %141 = sbr.rel (%p138) target = $region24
      $region23: #{sobel_filter.1} parent=5 // pred_region
        %s142 = ssub.s32 %s18, 1
        %s143 = sand.u32 %s31, 1
        %s144 = scalar_lea.sflag [#allocation3], %s143
        %s145 = sand.u32 %s31, 1
        %s146 = smul.addr %s145, 48
        %s147 = scalar_lea.vmem [#allocation2], %s146
        // Predicated region
        $region25: #{sobel_filter.1} parent=23 // pred_check
          %p148 = pneg %p44
        $region26: #{sobel_filter.1} parent=23 // pred_check_branch
          %150 = sbr.rel (%p148) target = $region28
        $region27: #{sobel_filter.1} parent=23 // pred_region
          %151 = dma.done %s144, 768
        $region28: #{sobel_filter.1} parent=23 // pred_fallthru
          _
        %s152 = sand.u32 %s31, 1
        %s153 = scalar_lea.sflag [#allocation3], %s152
        %s154 = sand.u32 %s31, 1
        %s155 = smul.addr %s154, 48
        %s156 = scalar_lea.vmem [#allocation2], %s155
        %p157 = pneg %p44
        %p158 = pneg %p41
        %p159 = pneg %p70
        %p160 = pneg %p67
        %s161 = sand.u32 %s57, 1
        %s162 = scalar_lea.sflag [#allocation4], %s161
        %s163 = sand.u32 %s57, 1
        %s164 = smul.addr %s163, 16
        %s165 = scalar_lea.vmem [#allocation5], %s164
        %p166 = pneg %p96
        %p167 = pneg %p93
        %s168 = sand.u32 %s83, 1
        %s169 = scalar_lea.sflag [#allocation7], %s168
        %s170 = sand.u32 %s83, 1
        %s171 = scalar_lea.vmem [#allocation6], %s170
        %v172 = vld [vmem:[%s147] sm:$0xff]
        %v173 = vld [vmem:[%s147 + $0x8] sm:$0xff]
        %v174 = vld [vmem:[%s147 + $0x10] sm:$0xff]
        %v175 = vld [vmem:[%s147 + $0x18] sm:$0xff]
        %v176 = vld [vmem:[%s147 + $0x20] sm:$0xff]
        %v177 = vld [vmem:[%s147 + $0x28] sm:$0xff]
        %v178 = vadd.f32 %v172, %v174
        %v179 = vadd.f32 %v173, %v175
        %v180 = vadd.f32 %v178, %v176
        %v181 = vadd.f32 %v179, %v177
        %184 = vrot.lane.b32.xlu0 %v180, 127
        %v185 = vpop.permute.xlu0 %184
        %186 = vrot.lane.b32.xlu0 %v181, 127
        %v187 = vpop.permute.xlu0 %186
        %190 = vrot.lane.b32.xlu0 %v180, 15
        %v191 = vpop.permute.xlu0 %190
        %192 = vrot.lane.b32.xlu0 %v181, 15
        %v193 = vpop.permute.xlu0 %192
        %vm196 = vcmask 121856
        %v197 = vsel %vm196, %v185, %v191
        %v198 = vsel %vm196, %v187, %v193
        %199 = vrot.lane.b32.xlu0 %v180, 126
        %v200 = vpop.permute.xlu0 %199
        %201 = vrot.lane.b32.xlu0 %v181, 126
        %v202 = vpop.permute.xlu0 %201
        %205 = vrot.lane.b32.xlu0 %v180, 14
        %v206 = vpop.permute.xlu0 %205
        %207 = vrot.lane.b32.xlu0 %v181, 14
        %v208 = vpop.permute.xlu0 %207
        %vm211 = vcmask 113664
        %v212 = vsel %vm211, %v200, %v206
        %v213 = vsel %vm211, %v202, %v208
        %214 = vrot.lane.b32.xlu0 %v180, 125
        %v215 = vpop.permute.xlu0 %214
        %216 = vrot.lane.b32.xlu0 %v181, 125
        %v217 = vpop.permute.xlu0 %216
        %220 = vrot.lane.b32.xlu0 %v180, 13
        %v221 = vpop.permute.xlu0 %220
        %222 = vrot.lane.b32.xlu0 %v181, 13
        %v223 = vpop.permute.xlu0 %222
        %vm226 = vcmask 105472
        %v227 = vsel %vm226, %v215, %v221
        %v228 = vsel %vm226, %v217, %v223
        %229 = vrot.lane.b32.xlu0 %v180, 124
        %v230 = vpop.permute.xlu0 %229
        %231 = vrot.lane.b32.xlu0 %v181, 124
        %v232 = vpop.permute.xlu0 %231
        %235 = vrot.lane.b32.xlu0 %v180, 12
        %v236 = vpop.permute.xlu0 %235
        %237 = vrot.lane.b32.xlu0 %v181, 12
        %v238 = vpop.permute.xlu0 %237
        %vm241 = vcmask 97280
        %v242 = vsel %vm241, %v230, %v236
        %v243 = vsel %vm241, %v232, %v238
        %244 = vrot.lane.b32.xlu0 %v180, 123
        %v245 = vpop.permute.xlu0 %244
        %246 = vrot.lane.b32.xlu0 %v181, 123
        %v247 = vpop.permute.xlu0 %246
        %250 = vrot.lane.b32.xlu0 %v180, 11
        %v251 = vpop.permute.xlu0 %250
        %252 = vrot.lane.b32.xlu0 %v181, 11
        %v253 = vpop.permute.xlu0 %252
        %vm256 = vcmask 89088
        %v257 = vsel %vm256, %v245, %v251
        %v258 = vsel %vm256, %v247, %v253
        %259 = vrot.lane.b32.xlu0 %v180, 122
        %v260 = vpop.permute.xlu0 %259
        %261 = vrot.lane.b32.xlu0 %v181, 122
        %v262 = vpop.permute.xlu0 %261
        %265 = vrot.lane.b32.xlu0 %v180, 10
        %v266 = vpop.permute.xlu0 %265
        %267 = vrot.lane.b32.xlu0 %v181, 10
        %v268 = vpop.permute.xlu0 %267
        %vm271 = vcmask 80896
        %v272 = vsel %vm271, %v260, %v266
        %v273 = vsel %vm271, %v262, %v268
        %v274 = vsub.f32 %v180, %v272
        %v275 = vsub.f32 %v181, %v273
        %v276 = vmul.f32 %v274, 4.0
        %v277 = vmul.f32 %v275, 4.0
        %v278 = vsub.f32 %v197, %v257
        %v279 = vsub.f32 %v198, %v258
        %v280 = vmul.f32 %v278, 2.0
        %v281 = vmul.f32 %v279, 2.0
        %v282 = vadd.f32 %v276, %v280
        %v283 = vadd.f32 %v277, %v281
        %v284 = vsub.f32 %v212, %v242
        %v285 = vsub.f32 %v213, %v243
        %v286 = vadd.f32 %v282, %v284
        %v287 = vadd.f32 %v283, %v285
        %v288 = vadd.f32 %v180, %v272
        %v289 = vadd.f32 %v181, %v273
        %v290 = vadd.f32 %v197, %v257
        %v291 = vadd.f32 %v198, %v258
        %v292 = vadd.f32 %v288, %v290
        %v293 = vadd.f32 %v289, %v291
        %v294 = vadd.f32 %v212, %v242
        %v295 = vadd.f32 %v213, %v243
        %v296 = vmul.f32 %v227, 2.0
        %v297 = vmul.f32 %v228, 2.0
        %v298 = vadd.f32 %v294, %v296
        %v299 = vadd.f32 %v295, %v297
        %v300 = vadd.f32 %v292, %v298
        %v301 = vadd.f32 %v293, %v299
        %vm304 = vcmask 1041408
        %v305 = vrot.slane %v286, 6
        %v306 = vrot.slane %v287, 6
        %v307 = vsel %vm304, %v305, %v306
        %v310 = vadd.f32 %v286, %v307
        %v311 = vadd.f32 %v287, %v306
        %vm312 = vcmask 1043456
        %v313 = vrot.slane %v286, 4
        %v314 = vrot.slane %v287, 4
        %v315 = vsel %vm312, %v313, %v314
        %v318 = vadd.f32 %v286, %v315
        %v319 = vadd.f32 %v287, %v314
        %vm322 = vcmask 1046528
        %v323 = vrot.slane %v318, 1
        %v324 = vrot.slane %v319, 1
        %v325 = vsel %vm322, %v323, %v324
        %v328 = vadd.f32 %v310, %v325
        %v329 = vadd.f32 %v311, %v324
        %vm330 = vcmask 1045504
        %v331 = vrot.slane %v286, 2
        %v332 = vrot.slane %v287, 2
        %v333 = vsel %vm330, %v331, %v332
        %v336 = vadd.f32 %v286, %v333
        %v337 = vadd.f32 %v287, %v332
        %v338 = vmul.f32 %v286, 2.0
        %v339 = vmul.f32 %v287, 2.0
        %v342 = vrot.slane %v338, 1
        %v343 = vrot.slane %v339, 1
        %v344 = vsel %vm322, %v342, %v343
        %v347 = vadd.f32 %v336, %v344
        %v348 = vadd.f32 %v337, %v343
        %v351 = vrot.slane %v347, 2
        %v352 = vrot.slane %v348, 2
        %v353 = vsel %vm330, %v351, %v352
        %v356 = vadd.f32 %v328, %v353
        %v357 = vadd.f32 %v329, %v352
        %v360 = vrot.slane %v300, 6
        %v361 = vrot.slane %v301, 6
        %v362 = vsel %vm304, %v360, %v361
        %v365 = vsub.f32 %v300, %v362
        %v366 = vsub.f32 %v301, %v361
        %v367 = vmul.f32 %v365, 4.0
        %v368 = vmul.f32 %v366, 4.0
        %v369 = vrot.slane %v300, 4
        %v370 = vrot.slane %v301, 4
        %v371 = vsel %vm312, %v369, %v370
        %v374 = vsub.f32 %v300, %v371
        %v375 = vsub.f32 %v301, %v370
        %v376 = vmul.f32 %v374, 2.0
        %v377 = vmul.f32 %v375, 2.0
        %v380 = vrot.slane %v376, 1
        %v381 = vrot.slane %v377, 1
        %v382 = vsel %vm322, %v380, %v381
        %v385 = vadd.f32 %v367, %v382
        %v386 = vadd.f32 %v368, %v381
        %v387 = vrot.slane %v300, 2
        %v388 = vrot.slane %v301, 2
        %v389 = vsel %vm330, %v387, %v388
        %v392 = vsub.f32 %v300, %v389
        %v393 = vsub.f32 %v301, %v388
        %v396 = vrot.slane %v392, 2
        %v397 = vrot.slane %v393, 2
        %v398 = vsel %vm330, %v396, %v397
        %v401 = vadd.f32 %v385, %v398
        %v402 = vadd.f32 %v386, %v397
        %v403 = vmul.f32 %v356, %v356
        %v404 = vmul.f32 %v357, %v357
        %v405 = vmul.f32 %v401, %v401
        %v406 = vmul.f32 %v402, %v402
        %v407 = vadd.f32 %v403, %v405
        %v408 = vadd.f32 %v404, %v406
        %v409 = vrsqrt.pop %v407
        %v410 = vmul.f32 %v407, %v409
        %vm411 = vcmp.eq.f32.partialorder %v407, inf
        %v412 = vsel %vm411, %v407, %v410
        %vm413 = vcmp.eq.f32.partialorder %v407, 0.0
        %v414 = vand.u32 %v407, 2147483648
        %v415 = vsel %vm413, %v414, %v412
        %v416 = vrsqrt.pop %v408
        %v417 = vmul.f32 %v408, %v416
        %vm418 = vcmp.eq.f32.partialorder %v408, inf
        %v419 = vsel %vm418, %v408, %v417
        %vm420 = vcmp.eq.f32.partialorder %v408, 0.0
        %v421 = vand.u32 %v408, 2147483648
        %v422 = vsel %vm420, %v421, %v419
        %424 = vset.pattern.permute.xlu0 0
        %425 = vperm.xlu0 %424, %v415
        %v426 = vpop.permute.xlu0 %425
        %429 = vset.pattern.permute.xlu0 0
        %430 = vperm.xlu0 %429, %v422
        %v431 = vpop.permute.xlu0 %430
        %433 = vset.pattern.permute.xlu0 9
        %434 = vperm.xlu0 %433, %v415
        %v435 = vpop.permute.xlu0 %434
        %437 = vset.pattern.permute.xlu0 9
        %438 = vperm.xlu0 %437, %v422
        %v439 = vpop.permute.xlu0 %438
        %441 = vrot.lane.b32.xlu0 %v415, 3
        %v442 = vpop.permute.xlu0 %441
        %443 = vrot.lane.b32.xlu0 %v422, 3
        %v444 = vpop.permute.xlu0 %443
        %vm447 = vcmask 23552
        %v448 = vsel %vm447, %v426, %v442
        %v449 = vsel %vm447, %v431, %v444
        %v450 = vsel %vm226, %v448, %v435
        %v451 = vsel %vm226, %v449, %v439
        %vm452 = vcmask 130048
        %453 = vst.msk [vmem:[%s165 + $0x3] sm:$0xff] %vm452, %v450
        %vm454 = vcmask 123904
        %455 = vst.msk [vmem:[%s165 + $0xb] sm:$0x3] %vm454, %v451
        %v456 = vlaneseq
        %v457 = vshrl.u32 %v456, 7
        %v458 = vsub.s32 0, %v457
        %v459 = vrot.slane %v450, %v458
        %vm460 = vcmask 124928
        %461 = vst.msk [vmem:[%s165] sm:$0x7] %vm460, %v459
        %v462 = vlaneseq
        %v463 = vshrl.u32 %v462, 7
        %v464 = vsub.s32 1, %v463
        %v465 = vrot.slane %v451, %v464
        %466 = vst.msk [vmem:[%s165 + $0xd] sm:$0x7] %vm460, %v465
        %v467 = vld [vmem:[%s165] sm:$0xff]
        %v468 = vld [vmem:[%s165 + $0x8] sm:$0xff]
        %v469 = vsel %vm452, %v467, inf
        %v470 = vsel %vm452, %v468, inf
        %v471 = vmin.f32 %v469, %v470
        %472 = vmin.xlane.f32.xlu0 %v471
        %v473 = vpop.xlane.xlu0 %472
        %v474 = vrot.slane %v473, 4
        %v475 = vmin.f32 %v473, %v474
        %v476 = vrot.slane %v475, 2
        %v477 = vmin.f32 %v475, %v476
        %v478 = vrot.slane %v477, 1
        %v479 = vmin.f32 %v477, %v478
        %s480 = vtos %v479
        %v481 = vstv %s480
        %vm482 = vcmask 0
        %483 = vst.msk [vmem:[%s171] sm:$0x1] %vm482, %v481
        %v484 = vsel %vm452, %v467, -inf
        %v485 = vsel %vm452, %v468, -inf
        %v486 = vmax.f32 %v484, %v485
        %487 = vmax.xlane.f32.xlu0 %v486
        %v488 = vpop.xlane.xlu0 %487
        %v489 = vrot.slane %v488, 4
        %v490 = vmax.f32 %v488, %v489
        %v491 = vrot.slane %v490, 2
        %v492 = vmax.f32 %v490, %v491
        %v493 = vrot.slane %v492, 1
        %v494 = vmax.f32 %v492, %v493
        %s495 = vtos %v494
        %v496 = vstv %s495
        %vm497 = vcmask 8200
        %498 = vst.msk [vmem:[%s171] sm:$0x1] %vm497, %v496
        %s499 = sand.u32 %s57, 1
        %s500 = scalar_lea.sflag [#allocation4], %s499
        %s501 = sand.u32 %s57, 1
        %s502 = smul.addr %s501, 16
        %s503 = scalar_lea.vmem [#allocation5], %s502
        %s504 = sand.u32 %s83, 1
        %s505 = scalar_lea.sflag [#allocation7], %s504
        %s506 = sand.u32 %s83, 1
        %s507 = scalar_lea.vmem [#allocation6], %s506
        // Predicated region
        $region29: #{sobel_filter.1} parent=23 // pred_check
          %p508 = pneg %p67
        $region30: #{sobel_filter.1} parent=23 // pred_check_branch
          %510 = sbr.rel (%p508) target = $region32
        $region31: #{sobel_filter.1} parent=23 // pred_region
          %s512 = ssub.s32 256, 256
          %513 = vsyncadd %s500, %s512
          %s514 = smul.addr %s23, 2
          %s515 = smul.addr %s514, 128
          %s516 = scalar_lea.hbm %s1, %s515
          %s517 = sshll.u32 %s503, 4
          %s518 = int_to_ptr.vmem [resolvable:$true] %s517
          %523 = dma.vmem_to_hbm [thread:$0]  %s518, 256, %s516, %s500, 128, 128, 8
        $region32: #{sobel_filter.1} parent=23 // pred_fallthru
          _
        // Predicated region
        $region33: #{sobel_filter.1} parent=23 // pred_check
          %p524 = pneg %p93
        $region34: #{sobel_filter.1} parent=23 // pred_check_branch
          %526 = sbr.rel (%p524) target = $region36
        $region35: #{sobel_filter.1} parent=23 // pred_region
          %s528 = ssub.s32 16, 16
          %529 = vsyncadd %s505, %s528
          %s530 = smul.addr %s23, 16
          %s531 = scalar_lea.hbm %s2, %s530
          %s533 = sshll.u32 %s507, 4
          %s534 = int_to_ptr.vmem [resolvable:$true] %s533
          %536 = dma.vmem_to_hbm [thread:$0]  %s534, 16, %s531, %s505
        $region36: #{sobel_filter.1} parent=23 // pred_fallthru
          _
      $region24: #{sobel_filter.1} parent=5 // pred_fallthru
        _
      %p537 = scmp.le.s32.totalorder 2, %s18
      // Predicated region
      $region37: #{sobel_filter.1} parent=5 // pred_check
        %p538 = pneg %p537
      $region38: #{sobel_filter.1} parent=5 // pred_check_branch
        %540 = sbr.rel (%p538) target = $region40
      $region39: #{sobel_filter.1} parent=5 // pred_region
        %s541 = ssub.s32 %s18, 2
        // Predicated region
        $region41: #{sobel_filter.1} parent=39 // pred_check
          %p542 = pneg %p73
        $region42: #{sobel_filter.1} parent=39 // pred_check_branch
          %544 = sbr.rel (%p542) target = $region44
        $region43: #{sobel_filter.1} parent=39 // pred_region
          %s545 = sand.u32 %s58, 1
          %s546 = scalar_lea.sflag [#allocation4], %s545
          %s547 = sand.u32 %s58, 1
          %s548 = smul.addr %s547, 16
          %s549 = scalar_lea.vmem [#allocation5], %s548
          %550 = dma.done %s546, 256
        $region44: #{sobel_filter.1} parent=39 // pred_fallthru
          _
        // Predicated region
        $region45: #{sobel_filter.1} parent=39 // pred_check
          %p551 = pneg %p99
        $region46: #{sobel_filter.1} parent=39 // pred_check_branch
          %553 = sbr.rel (%p551) target = $region48
        $region47: #{sobel_filter.1} parent=39 // pred_region
          %s554 = sand.u32 %s84, 1
          %s555 = scalar_lea.sflag [#allocation7], %s554
          %s556 = sand.u32 %s84, 1
          %s557 = scalar_lea.vmem [#allocation6], %s556
          %558 = dma.done %s555, 16
        $region48: #{sobel_filter.1} parent=39 // pred_fallthru
          _
      $region40: #{sobel_filter.1} parent=5 // pred_fallthru
        _
    $region6: #{sobel_filter.1} parent=1 // loop_footer
      %s22 = sadd.s32 1, %s18
    $region7: #{sobel_filter.1} parent=1 // loop_footer_branch
      %17 = sbr.rel target = $region3
    $region8: #{sobel_filter.1} parent=1 // loop_exit
      _
    %559 = vsyncpa [#allocation3], 1
    %s560 = scalar_lea.sflag [#allocation3], 1
    %561 = vsyncpa %s560, 1
    %562 = vsyncpa [#allocation4], 1
    %s563 = scalar_lea.sflag [#allocation4], 1
    %564 = vsyncpa %s563, 1
    %565 = vsyncpa [#allocation7], 1
    %s566 = scalar_lea.sflag [#allocation7], 1
    %567 = vsyncpa %s566, 1

</llo_original>
